<compile_context>
chip_gen: v5e
topology: v5e:2x2
jax: 0.10.0
libtpu: 0.0.40
codegen_flags: <defaults>
</compile_context>

<pallas_src>
import jax
import jax.numpy as jnp
from jax.experimental import pallas as pl
from jax.experimental.pallas import tpu as pltpu

_COLS_CANDIDATES = (2048, 1024, 512, 256, 128)  # lane-dense widths (multiples of 128)
_PAD_COLS = 512                                  # fallback width when padding is needed
_TARGET_TILE_BYTES = 4 << 20                     # ~4 MiB per tile buffer


def _hswish_kernel(x_ref, o_ref):
    # y = x * clip(x + 3, 0, 6) / 6, computed in f32 on the VPU.
    x = x_ref[...].astype(jnp.float32)
    y = x * jnp.clip(x + 3.0, 0.0, 6.0) * (1.0 / 6.0)
    o_ref[...] = y.astype(o_ref.dtype)


def _hswish_2d(x2d, tm):
    rows, cols = x2d.shape
    grid = -(-rows // tm)  # cdiv; last block may be ragged (Pallas masks the writes)
    return pl.pallas_call(
        _hswish_kernel,
        out_shape=jax.ShapeDtypeStruct((rows, cols), x2d.dtype),
        grid_spec=pltpu.PrefetchScalarGridSpec(
            num_scalar_prefetch=0,
            grid=(grid,),
            in_specs=[pl.BlockSpec((tm, cols), lambda i: (i, 0))],
            out_specs=pl.BlockSpec((tm, cols), lambda i: (i, 0)),
        ),
        compiler_params=pltpu.CompilerParams(
            dimension_semantics=("parallel",),
        ),
    )(x2d)


def _round_up(a, m):
    return -(-a // m) * m


def _pick_tm(rows, cols, itemsize):
    """Row-tile size: ~4 MiB per buffer, sublane-aligned, >=2 grid steps if possible."""
    sublane = max(8, 32 // itemsize)  # 8 for f32, 16 for bf16, 32 for int8/fp8
    tile_rows = max(sublane, (_TARGET_TILE_BYTES // (cols * itemsize)) // sublane * sublane)
    if rows > tile_rows:
        return tile_rows
    # Small tensor: try to split into two sublane-aligned blocks so v7x's two
    # TensorCores can both be used; otherwise one block spanning the full dim
    # (block_shape equal to the full array dim is always legal).
    half = _round_up(-(-rows // 2), sublane)
    return half if half < rows else rows


@jax.jit
def hswish(x):
    """Forward pass equivalent to PyTorch HSwish (inplace flag is a no-op in JAX)."""
    orig_shape = x.shape
    n = x.size
    if n == 0:
        return x
    itemsize = jnp.dtype(x.dtype).itemsize

    # Fast path: widest lane-dense column count that divides n -> no pad, no slice.
    cols = None
    for c in _COLS_CANDIDATES:
        if n % c == 0:
            cols = c
            break

    if cols is not None:
        rows = n // cols
        tm = _pick_tm(rows, cols, itemsize)
        out2d = _hswish_2d(x.reshape(rows, cols), tm)
        return out2d.reshape(orig_shape)

    # Slow path (n not a multiple of 128): pad the tail up to a multiple of 512
    # (<= 511 dead elements; hswish(0) == 0 and the tail is sliced off).
    cols = _PAD_COLS
    rows = -(-n // cols)
    flat = jnp.pad(x.reshape(-1), (0, rows * cols - n))
    tm = _pick_tm(rows, cols, itemsize)
    out2d = _hswish_2d(flat.reshape(rows, cols), tm)
    return out2d.reshape(-1)[:n].reshape(orig_shape)


def _reference(x):
    return x * jnp.clip(x + 3.0, 0.0, 6.0) / 6.0


if __name__ == "__main__":
    key = jax.random.PRNGKey(0)

    # Module config: HSwish applied to an NCHW activation tensor.
    # Main case (fast path, no pad / no slice).
    x0 = jax.random.normal(key, (2, 4, 16, 16), dtype=jnp.float32) * 3.0
    # Ragged-grid case: n = 3200 -> cols=128, rows=25, tm=16, grid=2 (masked tail block).
    x1 = jax.random.normal(key, (2, 4, 20, 20), dtype=jnp.float32) * 3.0
    # Pad-path case: n = 210 (not a multiple of 128).
    x2 = jax.random.normal(key, (2, 3, 5, 7), dtype=jnp.float32) * 3.0

    for x in (x0, x1, x2):
        out = jax.block_until_ready(hswish(x))
        ref = _reference(x)
        assert out.shape == x.shape, out.shape
        assert jnp.allclose(out, ref, rtol=1e-5, atol=1e-5), \
            float(jnp.max(jnp.abs(out - ref)))

    print("KERNEL_OK")
</pallas_src>

<mosaic_0001>
module attributes {stable_mosaic.version = 11 : i64} {
  func.func @_hswish_kernel(%arg0: i32, %arg1: memref<1x2048xf32, #tpu.memory_space<vmem>>, %arg2: memref<1x2048xf32, #tpu.memory_space<vmem>>) attributes {dimension_semantics = [#tpu.dimension_semantics<parallel>], iteration_bounds = array<i64: 1>, scalar_prefetch = 0 : i64, scratch_operands = 0 : i64, tpu.core_type = #tpu.core_type<tc>, window_params = [{transform_indices = @transform_0, window_bounds = array<i64: 1, 2048>}, {transform_indices = @transform_1, window_bounds = array<i64: 1, 2048>}]} {
    %c0 = arith.constant 0 : index
    %c0_0 = arith.constant 0 : index
    %0 = vector.load %arg1[%c0, %c0_0] : memref<1x2048xf32, #tpu.memory_space<vmem>>, vector<1x2048xf32>
    %cst = arith.constant 3.000000e+00 : f32
    %1 = vector.broadcast %cst : f32 to vector<1x2048xf32>
    %2 = arith.addf %0, %1 : vector<1x2048xf32>
    %cst_1 = arith.constant 0.000000e+00 : f32
    %cst_2 = arith.constant 6.000000e+00 : f32
    %3 = vector.broadcast %cst_1 : f32 to vector<1x2048xf32>
    %4 = arith.maximumf %3, %2 : vector<1x2048xf32>
    %5 = vector.broadcast %cst_2 : f32 to vector<1x2048xf32>
    %6 = arith.minimumf %5, %4 : vector<1x2048xf32>
    %7 = arith.mulf %0, %6 : vector<1x2048xf32>
    %cst_3 = arith.constant 0.166666672 : f32
    %8 = vector.broadcast %cst_3 : f32 to vector<1x2048xf32>
    %9 = arith.mulf %7, %8 : vector<1x2048xf32>
    %c0_4 = arith.constant 0 : index
    %c0_5 = arith.constant 0 : index
    %10 = vector.load %arg2[%c0_4, %c0_5] : memref<1x2048xf32, #tpu.memory_space<vmem>>, vector<1x2048xf32>
    tpu.vector_store %arg2[%c0_4, %c0_5], %9 {strides = array<i32>} : memref<1x2048xf32, #tpu.memory_space<vmem>>, vector<1x2048xf32>,
    return
  }
  func.func @transform_0(%arg0: i32) -> (i32, i32) {
    %c0_i32 = arith.constant 0 : i32
    %c0_i32_0 = arith.constant 0 : i32
    return %arg0, %c0_i32 : i32, i32
  }
  func.func @transform_1(%arg0: i32) -> (i32, i32) {
    %c0_i32 = arith.constant 0 : i32
    %c0_i32_0 = arith.constant 0 : i32
    return %arg0, %c0_i32 : i32, i32
  }
}

</mosaic_0001>

<llo_original>
// kernel: hswish.1
$region0: #{hswish.1}
  #allocation0 [shape = 'u32[]', space=smem, size = 0x4, offset = 0x4, fixed_abs, tag = 'smem constant byte address 0x4 - core index']
  #allocation1 [shape = 'u32[72,128]{1,0:T(1,128)}', space=vmem, size = 0x9000, scoped, tag = 'internal scratch']
  %s0 = inlined_call_operand.vmem [shape: f32[1,2048], index: 0, kind: input, shape index: {}]
  %s1 = inlined_call_operand.vmem [shape: f32[1,2048], index: 1, kind: output, shape index: {}]
  %s2 = sld [smem:[#allocation0]]
  $region14: #{hswish.1} parent=0
    _
  %s4 = ssub.s32 1, %s2
  %s5 = scalar_select 0, %s4, %s2
  // Predicated region
  $region2: #{hswish.1} parent=0 // pred_check
    _
  $region3: #{hswish.1} parent=0 // pred_check_branch
    %7 = sbr.rel (0) target = $region5
  $region4: #{hswish.1} parent=0 // pred_region
    _
  $region5: #{hswish.1} parent=0 // pred_fallthru
    _
  %v8 = vld [vmem:[%s0] sm:$0xff]
  %v9 = vld [vmem:[%s0 + $0x8] sm:$0xff]
  %v10 = vadd.f32 %v8, 3.0
  %v11 = vadd.f32 %v9, 3.0
  %v12 = vmax.f32 %v10, 0.0
  %v13 = vmax.f32 %v11, 0.0
  %v14 = vmin.f32 %v12, 6.0
  %v15 = vmin.f32 %v13, 6.0
  %v16 = vmul.f32 %v8, %v14
  %v17 = vmul.f32 %v9, %v15
  %v18 = vmul.f32 %v16, 0.16666667
  %v19 = vmul.f32 %v17, 0.16666667
  %20 = vst [vmem:[%s1] sm:$0xff] %v18
  %21 = vst [vmem:[%s1 + $0x8] sm:$0xff] %v19
  // Predicated region
  $region6: #{hswish.1} parent=0 // pred_check
    _
  $region7: #{hswish.1} parent=0 // pred_check_branch
    %23 = sbr.rel (0) target = $region9
  $region8: #{hswish.1} parent=0 // pred_region
    _
  $region9: #{hswish.1} parent=0 // pred_fallthru
    _
  // Predicated region
  $region10: #{hswish.1} parent=0 // pred_check
    _
  $region11: #{hswish.1} parent=0 // pred_check_branch
    %25 = sbr.rel (0) target = $region13
  $region12: #{hswish.1} parent=0 // pred_region
    _
  $region13: #{hswish.1} parent=0 // pred_fallthru
    _

</llo_original>
